<compile_context>
chip_gen: v5e
topology: v5e:2x2
jax: 0.10.0
libtpu: 0.0.40
codegen_flags: <defaults>
</compile_context>

<pallas_src>
import jax
import jax.numpy as jnp
from jax.experimental import pallas as pl
from jax.experimental.pallas import tpu as pltpu


def fcff_2l_kernel(x_ref, w1_ref, b1_ref, w2_ref, b2_ref, o_ref):
    # Layer 1: (BM, D) @ (D, H) on the MXU, f32 accumulate.
    h = jnp.dot(x_ref[...], w1_ref[...], preferred_element_type=jnp.float32)
    # Bias + ReLU in f32 on the VPU.
    h = jnp.maximum(h + b1_ref[...], 0.0)
    # Layer 2: out_features == 1, so skip the MXU entirely:
    # VPU elementwise multiply by the (1, H) weight row + XLU row-reduce.
    y = jnp.sum(h * w2_ref[...], axis=-1, keepdims=True)
    # b2 is a scalar living in SMEM.
    o_ref[...] = (y + b2_ref[0]).astype(o_ref.dtype)


def prepare_params(w1, b1, w2, b2, compute_dtype=jnp.bfloat16):
    """One-time parameter prep (hoisted out of the per-call path).

    w1: (H, D)   b1: (H,)   w2: (1, H)   b2: (1,)   -- PyTorch nn.Linear layout.
    """
    H, _ = w1.shape
    return {
        "w1_t": jnp.asarray(w1.T, dtype=compute_dtype),           # (D, H) MXU operand
        "b1_r": jnp.asarray(b1, jnp.float32).reshape(1, H),       # (1, H) f32 bias row
        "w2_r": jnp.asarray(w2, jnp.float32).reshape(1, H),       # (1, H) f32 row (VPU/XLU path)
        "b2_s": jnp.asarray(b2, jnp.float32).reshape(1),          # (1,)   SMEM scalar
        "compute_dtype": compute_dtype,
    }


def fcff_2l(x, params, *, block_m=512):
    """x: (B, D_in) float32.  Returns (B, 1) in x.dtype."""
    B, D = x.shape
    H = params["w1_t"].shape[1]
    cdt = params["compute_dtype"]

    # Batch tile: multiple of 8 (sublane rule) unless it equals the full batch.
    bm = min(block_m, B)
    if bm != B and bm % 8 != 0:
        bm = max(8, (bm // 8) * 8)
    grid = (pl.cdiv(B, bm),)  # ragged tail: OOB output rows are masked by Pallas.

    # Feed the MXU (and the X HBM stream) in the compute dtype (bf16 by default).
    x_c = x.astype(cdt)

    return pl.pallas_call(
        fcff_2l_kernel,
        out_shape=jax.ShapeDtypeStruct((B, 1), x.dtype),
        grid_spec=pl.GridSpec(
            grid=grid,
            in_specs=[
                # X stream: the only array that grows with B -> pipelined per tile.
                pl.BlockSpec((bm, D), lambda i: (i, 0)),
                # Weights / biases: same block every step -> stay VMEM-resident.
                pl.BlockSpec((D, H), lambda i: (0, 0)),
                pl.BlockSpec((1, H), lambda i: (0, 0)),
                pl.BlockSpec((1, H), lambda i: (0, 0)),
                # b2: scalar in SMEM (no padded (8,128) VMEM tile, no extra DMA tile).
                pl.BlockSpec(memory_space=pltpu.MemorySpace.SMEM),
            ],
            out_specs=pl.BlockSpec((bm, 1), lambda i: (i, 0)),
        ),
        compiler_params=pltpu.CompilerParams(
            # Independent batch tiles -> shard across TensorCores on v7x (no-op on v5e/v6e).
            dimension_semantics=("parallel",),
        ),
    )(x_c, params["w1_t"], params["b1_r"], params["w2_r"], params["b2_s"])


def _ref_forward(x, w1, b1, w2, b2):
    h = jnp.maximum(x @ w1.T + b1, 0.0)   # F.relu(L1(x))
    return h @ w2.T + b2                  # L2(h)


if __name__ == "__main__":
    # arch = [32, 64]: in_features=32, hidden=64, out_features=1.
    D_IN, HIDDEN, B = 32, 64, 512
    BLOCK_M = 128  # several grid steps to exercise the pipelined batch tiling

    key = jax.random.PRNGKey(0)
    k_x, k_w1, k_b1, k_w2, k_b2 = jax.random.split(key, 5)

    x = jax.random.normal(k_x, (B, D_IN), dtype=jnp.float32)
    w1 = jax.random.normal(k_w1, (HIDDEN, D_IN), dtype=jnp.float32) * 0.1
    b1 = jax.random.normal(k_b1, (HIDDEN,), dtype=jnp.float32) * 0.1
    w2 = jax.random.normal(k_w2, (1, HIDDEN), dtype=jnp.float32) * 0.1
    b2 = jax.random.normal(k_b2, (1,), dtype=jnp.float32) * 0.1

    ref = _ref_forward(x, w1, b1, w2, b2)

    # Exact-precision path (f32 MXU inputs) — tight tolerance.
    params_f32 = prepare_params(w1, b1, w2, b2, compute_dtype=jnp.float32)
    out_f32 = jax.block_until_ready(fcff_2l(x, params_f32, block_m=BLOCK_M))
    assert out_f32.shape == (B, 1)
    assert jnp.allclose(out_f32, ref, atol=1e-5, rtol=1e-5)

    # Fast path (bf16 MXU inputs, f32 accumulate) — expected small quantization error.
    params_bf16 = prepare_params(w1, b1, w2, b2, compute_dtype=jnp.bfloat16)
    out_bf16 = jax.block_until_ready(fcff_2l(x, params_bf16, block_m=BLOCK_M))
    assert out_bf16.shape == (B, 1)
    assert jnp.allclose(out_bf16, ref, atol=2e-2, rtol=2e-2)

    print("KERNEL_OK")
</pallas_src>

<mosaic_0001>
module attributes {stable_mosaic.version = 11 : i64} {
  func.func @fcff_2l_kernel(%arg0: i32, %arg1: memref<128x32xf32, #tpu.memory_space<vmem>>, %arg2: memref<32x64xf32, #tpu.memory_space<vmem>>, %arg3: memref<1x64xf32, #tpu.memory_space<vmem>>, %arg4: memref<1x64xf32, #tpu.memory_space<vmem>>, %arg5: memref<1xf32, #tpu.memory_space<smem>>, %arg6: memref<128x1xf32, #tpu.memory_space<vmem>>) attributes {dimension_semantics = [#tpu.dimension_semantics<parallel>], iteration_bounds = array<i64: 4>, scalar_prefetch = 0 : i64, scratch_operands = 0 : i64, tpu.core_type = #tpu.core_type<tc>, window_params = [{transform_indices = @transform_0, window_bounds = array<i64: 128, 32>}, {pipeline_mode = #tpu.pipeline_mode<synchronous>, transform_indices = @transform_1, window_bounds = array<i64: 32, 64>}, {pipeline_mode = #tpu.pipeline_mode<synchronous>, transform_indices = @transform_2, window_bounds = array<i64: 1, 64>}, {pipeline_mode = #tpu.pipeline_mode<synchronous>, transform_indices = @transform_3, window_bounds = array<i64: 1, 64>}, {transform_indices = @transform_4, window_bounds = array<i64: 1>}, {transform_indices = @transform_5, window_bounds = array<i64: 128, 1>}]} {
    %c0 = arith.constant 0 : index
    %c0_0 = arith.constant 0 : index
    %0 = vector.load %arg1[%c0, %c0_0] : memref<128x32xf32, #tpu.memory_space<vmem>>, vector<128x32xf32>
    %c0_1 = arith.constant 0 : index
    %c0_2 = arith.constant 0 : index
    %1 = vector.load %arg2[%c0_1, %c0_2] : memref<32x64xf32, #tpu.memory_space<vmem>>, vector<32x64xf32>
    %cst = arith.constant dense<0.000000e+00> : vector<128x64xf32>
    %2 = tpu.matmul %0, %1, %cst {dimension_numbers = #tpu.dot_dimension_numbers<[1], [0], [0], [1], [0, 0, 1, 1], [], []>} : vector<128x32xf32>, vector<32x64xf32>, vector<128x64xf32> -> vector<128x64xf32>
    %c0_3 = arith.constant 0 : index
    %c0_4 = arith.constant 0 : index
    %3 = vector.load %arg3[%c0_3, %c0_4] : memref<1x64xf32, #tpu.memory_space<vmem>>, vector<1x64xf32>
    %4 = vector.broadcast %3 : vector<1x64xf32> to vector<128x64xf32>
    %5 = arith.addf %2, %4 : vector<128x64xf32>
    %cst_5 = arith.constant 0.000000e+00 : f32
    %6 = vector.broadcast %cst_5 : f32 to vector<128x64xf32>
    %7 = arith.maximumf %5, %6 : vector<128x64xf32>
    %c0_6 = arith.constant 0 : index
    %c0_7 = arith.constant 0 : index
    %8 = vector.load %arg4[%c0_6, %c0_7] : memref<1x64xf32, #tpu.memory_space<vmem>>, vector<1x64xf32>
    %9 = vector.broadcast %8 : vector<1x64xf32> to vector<128x64xf32>
    %10 = arith.mulf %7, %9 : vector<128x64xf32>
    %cst_8 = arith.constant dense<0.000000e+00> : vector<128xf32>
    %11 = vector.multi_reduction <add>, %10, %cst_8 [1] : vector<128x64xf32> to vector<128xf32>
    %12 = vector.shape_cast %11 : vector<128xf32> to vector<128x1xf32>
    %c0_9 = arith.constant 0 : index
    %13 = memref.load %arg5[%c0_9] : memref<1xf32, #tpu.memory_space<smem>>
    %14 = vector.broadcast %13 : f32 to vector<128x1xf32>
    %15 = arith.addf %12, %14 : vector<128x1xf32>
    %c0_10 = arith.constant 0 : index
    %c0_11 = arith.constant 0 : index
    %16 = vector.load %arg6[%c0_10, %c0_11] : memref<128x1xf32, #tpu.memory_space<vmem>>, vector<128x1xf32>
    tpu.vector_store %arg6[%c0_10, %c0_11], %15 {strides = array<i32>} : memref<128x1xf32, #tpu.memory_space<vmem>>, vector<128x1xf32>,
    return
  }
  func.func @transform_0(%arg0: i32) -> (i32, i32) {
    %c0_i32 = arith.constant 0 : i32
    %c0_i32_0 = arith.constant 0 : i32
    return %arg0, %c0_i32 : i32, i32
  }
  func.func @transform_1(%arg0: i32) -> (i32, i32) {
    %c0_i32 = arith.constant 0 : i32
    %c0_i32_0 = arith.constant 0 : i32
    %c0_i32_1 = arith.constant 0 : i32
    return %c0_i32, %c0_i32_0 : i32, i32
  }
  func.func @transform_2(%arg0: i32) -> (i32, i32) {
    %c0_i32 = arith.constant 0 : i32
    %c0_i32_0 = arith.constant 0 : i32
    %c0_i32_1 = arith.constant 0 : i32
    return %c0_i32, %c0_i32_0 : i32, i32
  }
  func.func @transform_3(%arg0: i32) -> (i32, i32) {
    %c0_i32 = arith.constant 0 : i32
    %c0_i32_0 = arith.constant 0 : i32
    %c0_i32_1 = arith.constant 0 : i32
    return %c0_i32, %c0_i32_0 : i32, i32
  }
  func.func @transform_4(%arg0: i32) -> i32 {
    %c0_i32 = arith.constant 0 : i32
    %c0_i32_0 = arith.constant 0 : i32
    return %c0_i32 : i32
  }
  func.func @transform_5(%arg0: i32) -> (i32, i32) {
    %c0_i32 = arith.constant 0 : i32
    %c0_i32_0 = arith.constant 0 : i32
    return %arg0, %c0_i32 : i32, i32
  }
}

</mosaic_0001>

<llo_original>
// kernel: tpu_custom_call.1
$region0: #{tpu_custom_call.1}
  #allocation0 [shape = 'u32[]', space=smem, size = 0x4, offset = 0x4, fixed_abs, tag = 'smem constant byte address 0x4 - core index']
  #allocation1 [shape = 'u32[72,128]{1,0:T(1,128)}', space=vmem, size = 0x9000, scoped, tag = 'internal scratch']
  #allocation2 [shape = 'f32[1]{0:T(128)S(6)}', space=smem, size = 0x200, scoped, tag = 'scoped memory for tpu_custom_call.1']
  %s0 = inlined_call_operand.vmem [shape: f32[512,32], index: 0, kind: input, shape index: {}]
  %s1 = inlined_call_operand.vmem [shape: f32[32,64], index: 1, kind: input, shape index: {}]
  %s2 = inlined_call_operand.vmem [shape: f32[1,64], index: 2, kind: input, shape index: {}]
  %s3 = inlined_call_operand.vmem [shape: f32[1,64], index: 3, kind: input, shape index: {}]
  %s4 = inlined_call_operand.<no memory space> [shape: f32[1], index: 4, kind: input, shape index: {}]
  %s5 = inlined_call_operand.vmem [shape: f32[512,1], index: 5, kind: output, shape index: {}]
  %s6 = sld [smem:[#allocation0]]
  $region53: #{tpu_custom_call.1} parent=0
    _
  %s8 = ssub.s32 1, %s6
  %s9 = scalar_select 0, %s8, %s6
  %10 = sst [smem:[#allocation2]] %s4
  loop: start=0, step=1, limit=6
  $region2: #{tpu_custom_call.1} parent=0 // loop_pre_header
    _
  $region3: #{tpu_custom_call.1} parent=0 // loop_header
    %s12 = sphi 0, %s16
    %p13 = scmp.ge.s32.totalorder %s12, 6
    %s22 = sphi 0, %s24
    %s25 = sphi 0, %s22
    %s26 = sphi 0, %s25
    %s42 = sphi 0, %s26
    %s46 = sphi 0, %s46
    %s48 = sphi 0, %s46
    %s49 = sphi 0, %s48
    %s63 = sphi 0, %s49
    %s67 = sphi 0, %s67
    %s69 = sphi 0, %s67
    %s70 = sphi 0, %s69
    %s84 = sphi 0, %s70
    %s88 = sphi 0, %s88
    %s90 = sphi 0, %s88
    %s91 = sphi 0, %s90
    %s105 = sphi 0, %s91
    %s109 = sphi 0, %s109
    %s111 = sphi 0, %s109
    %s112 = sphi 0, %s111
    %s126 = sphi 0, %s112
    %s132 = sphi 0, %s134
    %s135 = sphi 0, %s132
    %s136 = sphi 0, %s135
    %s152 = sphi 0, %s136
  $region4: #{tpu_custom_call.1} parent=0 // loop_header_branch
    %15 = sbr.rel (%p13) target = $region8
  $region5: #{tpu_custom_call.1} parent=0 // loop_body
    %s17 = ssub.s32 %s12, 1
    %s18 = ssub.s32 %s12, 2
    %s19 = sadd.s32 %s12, 1
    %s20 = ssub.s32 %s12, %s19
    %p21 = scmp.eq.s32.totalorder %s20, 0
    %s23 = sadd.s32 %s22, 1
    %s24 = scalar_select %p21, %s22, %s23
    %p27 = pneg %p21
    %p28 = scmp.eq.s32.totalorder %s12, 3
    %p29 = por %p27, %p28
    %p30 = scmp.ne.s32.totalorder %s22, %s25
    %p31 = scmp.eq.s32.totalorder %s12, 0
    %p32 = por %p30, %p31
    %p33 = scmp.ne.s32.totalorder %s22, %s25
    %p34 = scmp.eq.s32.totalorder %s17, 3
    %p35 = por %p33, %p34
    %p36 = scmp.ne.s32.totalorder %s25, %s26
    %p37 = scmp.eq.s32.totalorder %s17, 0
    %p38 = por %p36, %p37
    %p39 = scmp.ne.s32.totalorder %s25, %s26
    %p40 = scmp.eq.s32.totalorder %s18, 3
    %p41 = por %p39, %p40
    %p43 = scmp.ne.s32.totalorder %s26, %s42
    %p44 = scmp.eq.s32.totalorder %s18, 0
    %p45 = por %p43, %p44
    %s47 = sadd.s32 %s46, 1
    %p50 = scmp.eq.s32.totalorder %s12, 3
    %p51 = scmp.ne.s32.totalorder %s46, %s48
    %p52 = scmp.eq.s32.totalorder %s12, 0
    %p53 = por %p51, %p52
    %p54 = scmp.ne.s32.totalorder %s46, %s48
    %p55 = scmp.eq.s32.totalorder %s17, 3
    %p56 = por %p54, %p55
    %p57 = scmp.ne.s32.totalorder %s48, %s49
    %p58 = scmp.eq.s32.totalorder %s17, 0
    %p59 = por %p57, %p58
    %p60 = scmp.ne.s32.totalorder %s48, %s49
    %p61 = scmp.eq.s32.totalorder %s18, 3
    %p62 = por %p60, %p61
    %p64 = scmp.ne.s32.totalorder %s49, %s63
    %p65 = scmp.eq.s32.totalorder %s18, 0
    %p66 = por %p64, %p65
    %s68 = sadd.s32 %s67, 1
    %p71 = scmp.eq.s32.totalorder %s12, 3
    %p72 = scmp.ne.s32.totalorder %s67, %s69
    %p73 = scmp.eq.s32.totalorder %s12, 0
    %p74 = por %p72, %p73
    %p75 = scmp.ne.s32.totalorder %s67, %s69
    %p76 = scmp.eq.s32.totalorder %s17, 3
    %p77 = por %p75, %p76
    %p78 = scmp.ne.s32.totalorder %s69, %s70
    %p79 = scmp.eq.s32.totalorder %s17, 0
    %p80 = por %p78, %p79
    %p81 = scmp.ne.s32.totalorder %s69, %s70
    %p82 = scmp.eq.s32.totalorder %s18, 3
    %p83 = por %p81, %p82
    %p85 = scmp.ne.s32.totalorder %s70, %s84
    %p86 = scmp.eq.s32.totalorder %s18, 0
    %p87 = por %p85, %p86
    %s89 = sadd.s32 %s88, 1
    %p92 = scmp.eq.s32.totalorder %s12, 3
    %p93 = scmp.ne.s32.totalorder %s88, %s90
    %p94 = scmp.eq.s32.totalorder %s12, 0
    %p95 = por %p93, %p94
    %p96 = scmp.ne.s32.totalorder %s88, %s90
    %p97 = scmp.eq.s32.totalorder %s17, 3
    %p98 = por %p96, %p97
    %p99 = scmp.ne.s32.totalorder %s90, %s91
    %p100 = scmp.eq.s32.totalorder %s17, 0
    %p101 = por %p99, %p100
    %p102 = scmp.ne.s32.totalorder %s90, %s91
    %p103 = scmp.eq.s32.totalorder %s18, 3
    %p104 = por %p102, %p103
    %p106 = scmp.ne.s32.totalorder %s91, %s105
    %p107 = scmp.eq.s32.totalorder %s18, 0
    %p108 = por %p106, %p107
    %s110 = sadd.s32 %s109, 1
    %p113 = scmp.eq.s32.totalorder %s12, 3
    %p114 = scmp.ne.s32.totalorder %s109, %s111
    %p115 = scmp.eq.s32.totalorder %s12, 0
    %p116 = por %p114, %p115
    %p117 = scmp.ne.s32.totalorder %s109, %s111
    %p118 = scmp.eq.s32.totalorder %s17, 3
    %p119 = por %p117, %p118
    %p120 = scmp.ne.s32.totalorder %s111, %s112
    %p121 = scmp.eq.s32.totalorder %s17, 0
    %p122 = por %p120, %p121
    %p123 = scmp.ne.s32.totalorder %s111, %s112
    %p124 = scmp.eq.s32.totalorder %s18, 3
    %p125 = por %p123, %p124
    %p127 = scmp.ne.s32.totalorder %s112, %s126
    %p128 = scmp.eq.s32.totalorder %s18, 0
    %p129 = por %p127, %p128
    %s130 = ssub.s32 %s12, %s19
    %p131 = scmp.eq.s32.totalorder %s130, 0
    %s133 = sadd.s32 %s132, 1
    %s134 = scalar_select %p131, %s132, %s133
    %p137 = pneg %p131
    %p138 = scmp.eq.s32.totalorder %s12, 3
    %p139 = por %p137, %p138
    %p140 = scmp.ne.s32.totalorder %s132, %s135
    %p141 = scmp.eq.s32.totalorder %s12, 0
    %p142 = por %p140, %p141
    %p143 = scmp.ne.s32.totalorder %s132, %s135
    %p144 = scmp.eq.s32.totalorder %s17, 3
    %p145 = por %p143, %p144
    %p146 = scmp.ne.s32.totalorder %s135, %s136
    %p147 = scmp.eq.s32.totalorder %s17, 0
    %p148 = por %p146, %p147
    %p149 = scmp.ne.s32.totalorder %s135, %s136
    %p150 = scmp.eq.s32.totalorder %s18, 3
    %p151 = por %p149, %p150
    %p153 = scmp.ne.s32.totalorder %s136, %s152
    %p154 = scmp.eq.s32.totalorder %s18, 0
    %p155 = por %p153, %p154
    %p156 = scmp.le.s32.totalorder 1, %s12
    %p157 = scmp.lt.s32.totalorder %s12, 5
    %p158 = pnand %p156, %p157
    %p159 = pneg %p158
    // Predicated region
    $region9: #{tpu_custom_call.1} parent=5 // pred_check
      _
    $region10: #{tpu_custom_call.1} parent=5 // pred_check_branch
      %161 = sbr.rel (%p158) target = $region12
    $region11: #{tpu_custom_call.1} parent=5 // pred_region
      %s162 = ssub.s32 %s12, 1
      // Predicated region
      $region13: #{tpu_custom_call.1} parent=11 // pred_check
        %p163 = pneg %p59
      $region14: #{tpu_custom_call.1} parent=11 // pred_check_branch
        %165 = sbr.rel (%p163) target = $region16
      $region15: #{tpu_custom_call.1} parent=11 // pred_region
        _
      $region16: #{tpu_custom_call.1} parent=11 // pred_fallthru
        _
      // Predicated region
      $region17: #{tpu_custom_call.1} parent=11 // pred_check
        %p166 = pneg %p80
      $region18: #{tpu_custom_call.1} parent=11 // pred_check_branch
        %168 = sbr.rel (%p166) target = $region20
      $region19: #{tpu_custom_call.1} parent=11 // pred_region
        _
      $region20: #{tpu_custom_call.1} parent=11 // pred_fallthru
        _
      // Predicated region
      $region21: #{tpu_custom_call.1} parent=11 // pred_check
        %p169 = pneg %p101
      $region22: #{tpu_custom_call.1} parent=11 // pred_check_branch
        %171 = sbr.rel (%p169) target = $region24
      $region23: #{tpu_custom_call.1} parent=11 // pred_region
        _
      $region24: #{tpu_custom_call.1} parent=11 // pred_fallthru
        _
      // Predicated region
      $region25: #{tpu_custom_call.1} parent=11 // pred_check
        %p172 = pneg %p122
      $region26: #{tpu_custom_call.1} parent=11 // pred_check_branch
        %174 = sbr.rel (%p172) target = $region28
      $region27: #{tpu_custom_call.1} parent=11 // pred_region
        _
      $region28: #{tpu_custom_call.1} parent=11 // pred_fallthru
        _
    $region12: #{tpu_custom_call.1} parent=5 // pred_fallthru
      _
    %p175 = scmp.lt.s32.totalorder %s12, 4
    // Predicated region
    $region29: #{tpu_custom_call.1} parent=5 // pred_check
      %p176 = pneg %p175
    $region30: #{tpu_custom_call.1} parent=5 // pred_check_branch
      %178 = sbr.rel (%p176) target = $region32
    $region31: #{tpu_custom_call.1} parent=5 // pred_region
      // Predicated region
      $region33: #{tpu_custom_call.1} parent=31 // pred_check
        %p179 = pneg %p32
      $region34: #{tpu_custom_call.1} parent=31 // pred_check_branch
        %181 = sbr.rel (%p179) target = $region36
      $region35: #{tpu_custom_call.1} parent=31 // pred_region
        %s182 = smul.u32 16, %s12
        %p183 = scmp.lt.s32.totalorder %s182, 63
        %s184 = scalar_select %p183, %s182, 63
        %s185 = smul.addr %s184, 8
        %s186 = scalar_lea.vmem %s0, %s185
        %s187 = smul.u32 16, %s12
      $region36: #{tpu_custom_call.1} parent=31 // pred_fallthru
        _
    $region32: #{tpu_custom_call.1} parent=5 // pred_fallthru
      _
    %p188 = scmp.le.s32.totalorder 1, %s12
    %p189 = scmp.lt.s32.totalorder %s12, 5
    %p190 = pnand %p188, %p189
    %p191 = pneg %p190
    // Predicated region
    $region37: #{tpu_custom_call.1} parent=5 // pred_check
      _
    $region38: #{tpu_custom_call.1} parent=5 // pred_check_branch
      %193 = sbr.rel (%p190) target = $region40
    $region39: #{tpu_custom_call.1} parent=5 // pred_region
      %s194 = ssub.s32 %s12, 1
      %s195 = smul.u32 16, %s17
      %p196 = scmp.lt.s32.totalorder %s195, 63
      %s197 = scalar_select %p196, %s195, 63
      %s198 = smul.addr %s197, 8
      %s199 = scalar_lea.vmem %s0, %s198
      %p200 = pneg %p38
      %p201 = pneg %p35
      %p202 = pneg %p59
      %p203 = pneg %p56
      %p204 = pneg %p80
      %p205 = pneg %p77
      %p206 = pneg %p101
      %p207 = pneg %p98
      %p208 = pneg %p122
      %p209 = pneg %p119
      %p210 = pneg %p148
      %p211 = pneg %p145
      %s212 = smul.u32 16, %s17
      %p213 = scmp.lt.s32.totalorder %s212, 63
      %s214 = scalar_select %p213, %s212, 63
      %s215 = smul.addr %s214, 8
      %s216 = scalar_lea.vmem %s5, %s215
      %s217 = smul.u32 16, %s17
      %p218 = scmp.lt.s32.totalorder %s217, 63
      %s219 = scalar_select %p218, %s217, 63
      %s220 = smul.addr %s219, 8
      %s221 = scalar_lea.vmem %s0, %s220
      %s222 = smul.u32 16, %s17
      %s223 = smul.u32 16, %s17
      %p224 = scmp.lt.s32.totalorder %s223, 63
      %s225 = scalar_select %p224, %s223, 63
      %s226 = smul.addr %s225, 8
      %s227 = scalar_lea.vmem %s5, %s226
      %s228 = smul.u32 16, %s17
      %v229 = vld [vmem:[%s221] sm:$0xff]
      %v230 = vld [vmem:[%s221 + $0x8] sm:$0xff]
      %v231 = vld [vmem:[%s221 + $0x10] sm:$0xff]
      %v232 = vld [vmem:[%s221 + $0x18] sm:$0xff]
      %v233 = vld [vmem:[%s221 + $0x20] sm:$0xff]
      %v234 = vld [vmem:[%s221 + $0x28] sm:$0xff]
      %v235 = vld [vmem:[%s221 + $0x30] sm:$0xff]
      %v236 = vld [vmem:[%s221 + $0x38] sm:$0xff]
      %v237 = vld [vmem:[%s221 + $0x40] sm:$0xff]
      %v238 = vld [vmem:[%s221 + $0x48] sm:$0xff]
      %v239 = vld [vmem:[%s221 + $0x50] sm:$0xff]
      %v240 = vld [vmem:[%s221 + $0x58] sm:$0xff]
      %v241 = vld [vmem:[%s221 + $0x60] sm:$0xff]
      %v242 = vld [vmem:[%s221 + $0x68] sm:$0xff]
      %v243 = vld [vmem:[%s221 + $0x70] sm:$0xff]
      %v244 = vld [vmem:[%s221 + $0x78] sm:$0xff]
      %v245 = vld [vmem:[%s1] sm:$0xff]
      %v246 = vld [vmem:[%s1 + $0x8] sm:$0xff]
      %v247 = vld [vmem:[%s1 + $0x10] sm:$0xff]
      %v248 = vld [vmem:[%s1 + $0x18] sm:$0xff]
      %v249 = vld [vmem:[%s2] sm:$0x1]
      %v251 = vperm.slane %v249, 0
      %vm253 = vcmask 261120
      %v255 = vsel %vm253, %v229, 0
      %v258 = vsel %vm253, %v230, 0
      %v261 = vsel %vm253, %v231, 0
      %v264 = vsel %vm253, %v232, 0
      %v267 = vsel %vm253, %v233, 0
      %v270 = vsel %vm253, %v234, 0
      %v273 = vsel %vm253, %v235, 0
      %v276 = vsel %vm253, %v236, 0
      %v279 = vsel %vm253, %v237, 0
      %v282 = vsel %vm253, %v238, 0
      %v285 = vsel %vm253, %v239, 0
      %v288 = vsel %vm253, %v240, 0
      %v291 = vsel %vm253, %v241, 0
      %v294 = vsel %vm253, %v242, 0
      %v297 = vsel %vm253, %v243, 0
      %v300 = vsel %vm253, %v244, 0
      %302 = vmatpush.msra.mxu0 0.0
      %303 = vmatpush.msra.mxu0 0.0
      %304 = vmatpush.msra.mxu0 0.0
      %305 = vmatpush.msra.mxu0 0.0
      %306 = vmatpush.msra.mxu0 0.0
      %307 = vmatpush.msra.mxu0 0.0
      %308 = vmatpush.msra.mxu0 0.0
      %309 = vmatpush.msra.mxu0 0.0
      %310 = vmatpush.msra.mxu0 0.0
      %311 = vmatpush.msra.mxu0 0.0
      %312 = vmatpush.msra.mxu0 0.0
      %313 = vmatpush.msra.mxu0 0.0
      %314 = vmatpush.msra.mxu0 %v248
      %315 = vmatpush.msra.mxu0 %v247
      %316 = vmatpush.msra.mxu0 %v246
      %317 = vmatpush.msra.mxu0 %v245
      %318 = vmatmul.f32.gmra.mxu0 %v255
      %v319 = vpop.f32.mrf.mxu0
      %v320 = vadd.f32 %v251, %v319
      %321 = vmatmul.f32.gmra.mxu0 %v258
      %v322 = vpop.f32.mrf.mxu0
      %v323 = vadd.f32 %v251, %v322
      %324 = vmatmul.f32.gmra.mxu0 %v261
      %v325 = vpop.f32.mrf.mxu0
      %v326 = vadd.f32 %v251, %v325
      %327 = vmatmul.f32.gmra.mxu0 %v264
      %v328 = vpop.f32.mrf.mxu0
      %v329 = vadd.f32 %v251, %v328
      %330 = vmatmul.f32.gmra.mxu0 %v267
      %v331 = vpop.f32.mrf.mxu0
      %v332 = vadd.f32 %v251, %v331
      %333 = vmatmul.f32.gmra.mxu0 %v270
      %v334 = vpop.f32.mrf.mxu0
      %v335 = vadd.f32 %v251, %v334
      %336 = vmatmul.f32.gmra.mxu0 %v273
      %v337 = vpop.f32.mrf.mxu0
      %v338 = vadd.f32 %v251, %v337
      %339 = vmatmul.f32.gmra.mxu0 %v276
      %v340 = vpop.f32.mrf.mxu0
      %v341 = vadd.f32 %v251, %v340
      %342 = vmatmul.f32.gmra.mxu0 %v279
      %v343 = vpop.f32.mrf.mxu0
      %v344 = vadd.f32 %v251, %v343
      %345 = vmatmul.f32.gmra.mxu0 %v282
      %v346 = vpop.f32.mrf.mxu0
      %v347 = vadd.f32 %v251, %v346
      %348 = vmatmul.f32.gmra.mxu0 %v285
      %v349 = vpop.f32.mrf.mxu0
      %v350 = vadd.f32 %v251, %v349
      %351 = vmatmul.f32.gmra.mxu0 %v288
      %v352 = vpop.f32.mrf.mxu0
      %v353 = vadd.f32 %v251, %v352
      %354 = vmatmul.f32.gmra.mxu0 %v291
      %v355 = vpop.f32.mrf.mxu0
      %v356 = vadd.f32 %v251, %v355
      %357 = vmatmul.f32.gmra.mxu0 %v294
      %v358 = vpop.f32.mrf.mxu0
      %v359 = vadd.f32 %v251, %v358
      %360 = vmatmul.f32.gmra.mxu0 %v297
      %v361 = vpop.f32.mrf.mxu0
      %v362 = vadd.f32 %v251, %v361
      %363 = vmatmul.f32.gmra.mxu0 %v300
      %v364 = vpop.f32.mrf.mxu0
      %v365 = vadd.f32 %v251, %v364
      %366 = vdwg.mxu0
      %v367 = vmax.f32 %v320, 0.0
      %v368 = vmax.f32 %v323, 0.0
      %v369 = vmax.f32 %v326, 0.0
      %v370 = vmax.f32 %v329, 0.0
      %v371 = vmax.f32 %v332, 0.0
      %v372 = vmax.f32 %v335, 0.0
      %v373 = vmax.f32 %v338, 0.0
      %v374 = vmax.f32 %v341, 0.0
      %v375 = vmax.f32 %v344, 0.0
      %v376 = vmax.f32 %v347, 0.0
      %v377 = vmax.f32 %v350, 0.0
      %v378 = vmax.f32 %v353, 0.0
      %v379 = vmax.f32 %v356, 0.0
      %v380 = vmax.f32 %v359, 0.0
      %v381 = vmax.f32 %v362, 0.0
      %v382 = vmax.f32 %v365, 0.0
      %v383 = vld [vmem:[%s3] sm:$0x1]
      %v385 = vperm.slane %v383, 0
      %v387 = vmul.f32 %v367, %v385
      %v388 = vmul.f32 %v368, %v385
      %v389 = vmul.f32 %v369, %v385
      %v390 = vmul.f32 %v370, %v385
      %v391 = vmul.f32 %v371, %v385
      %v392 = vmul.f32 %v372, %v385
      %v393 = vmul.f32 %v373, %v385
      %v394 = vmul.f32 %v374, %v385
      %v395 = vmul.f32 %v375, %v385
      %v396 = vmul.f32 %v376, %v385
      %v397 = vmul.f32 %v377, %v385
      %v398 = vmul.f32 %v378, %v385
      %v399 = vmul.f32 %v379, %v385
      %v400 = vmul.f32 %v380, %v385
      %v401 = vmul.f32 %v381, %v385
      %v402 = vmul.f32 %v382, %v385
      %vm403 = vcmask 523264
      %v404 = vsel %vm403, %v387, 0.0
      %405 = vadd.xlane.f32.xlu0 %v404
      %v406 = vpop.xlane.xlu0 %405
      %v407 = vsel %vm403, %v388, 0.0
      %408 = vadd.xlane.f32.xlu0 %v407
      %v409 = vpop.xlane.xlu0 %408
      %v410 = vsel %vm403, %v389, 0.0
      %411 = vadd.xlane.f32.xlu0 %v410
      %v412 = vpop.xlane.xlu0 %411
      %v413 = vsel %vm403, %v390, 0.0
      %414 = vadd.xlane.f32.xlu0 %v413
      %v415 = vpop.xlane.xlu0 %414
      %v416 = vsel %vm403, %v391, 0.0
      %417 = vadd.xlane.f32.xlu0 %v416
      %v418 = vpop.xlane.xlu0 %417
      %v419 = vsel %vm403, %v392, 0.0
      %420 = vadd.xlane.f32.xlu0 %v419
      %v421 = vpop.xlane.xlu0 %420
      %v422 = vsel %vm403, %v393, 0.0
      %423 = vadd.xlane.f32.xlu0 %v422
      %v424 = vpop.xlane.xlu0 %423
      %v425 = vsel %vm403, %v394, 0.0
      %426 = vadd.xlane.f32.xlu0 %v425
      %v427 = vpop.xlane.xlu0 %426
      %v428 = vsel %vm403, %v395, 0.0
      %429 = vadd.xlane.f32.xlu0 %v428
      %v430 = vpop.xlane.xlu0 %429
      %v431 = vsel %vm403, %v396, 0.0
      %432 = vadd.xlane.f32.xlu0 %v431
      %v433 = vpop.xlane.xlu0 %432
      %v434 = vsel %vm403, %v397, 0.0
      %435 = vadd.xlane.f32.xlu0 %v434
      %v436 = vpop.xlane.xlu0 %435
      %v437 = vsel %vm403, %v398, 0.0
      %438 = vadd.xlane.f32.xlu0 %v437
      %v439 = vpop.xlane.xlu0 %438
      %v440 = vsel %vm403, %v399, 0.0
      %441 = vadd.xlane.f32.xlu0 %v440
      %v442 = vpop.xlane.xlu0 %441
      %v443 = vsel %vm403, %v400, 0.0
      %444 = vadd.xlane.f32.xlu0 %v443
      %v445 = vpop.xlane.xlu0 %444
      %v446 = vsel %vm403, %v401, 0.0
      %447 = vadd.xlane.f32.xlu0 %v446
      %v448 = vpop.xlane.xlu0 %447
      %v449 = vsel %vm403, %v402, 0.0
      %450 = vadd.xlane.f32.xlu0 %v449
      %v451 = vpop.xlane.xlu0 %450
      %s452 = sld [smem:[#allocation2]]
      %v453 = vstv %s452
      %v454 = vadd.f32 %v406, %v453
      %v455 = vadd.f32 %v409, %v453
      %v456 = vadd.f32 %v412, %v453
      %v457 = vadd.f32 %v415, %v453
      %v458 = vadd.f32 %v418, %v453
      %v459 = vadd.f32 %v421, %v453
      %v460 = vadd.f32 %v424, %v453
      %v461 = vadd.f32 %v427, %v453
      %v462 = vadd.f32 %v430, %v453
      %v463 = vadd.f32 %v433, %v453
      %v464 = vadd.f32 %v436, %v453
      %v465 = vadd.f32 %v439, %v453
      %v466 = vadd.f32 %v442, %v453
      %v467 = vadd.f32 %v445, %v453
      %v468 = vadd.f32 %v448, %v453
      %v469 = vadd.f32 %v451, %v453
      %vm470 = vcmask 7168
      %471 = vst.msk [vmem:[%s227] sm:$0xff] %vm470, %v454
      %472 = vst.msk [vmem:[%s227 + $0x8] sm:$0xff] %vm470, %v455
      %473 = vst.msk [vmem:[%s227 + $0x10] sm:$0xff] %vm470, %v456
      %474 = vst.msk [vmem:[%s227 + $0x18] sm:$0xff] %vm470, %v457
      %475 = vst.msk [vmem:[%s227 + $0x20] sm:$0xff] %vm470, %v458
      %476 = vst.msk [vmem:[%s227 + $0x28] sm:$0xff] %vm470, %v459
      %477 = vst.msk [vmem:[%s227 + $0x30] sm:$0xff] %vm470, %v460
      %478 = vst.msk [vmem:[%s227 + $0x38] sm:$0xff] %vm470, %v461
      %479 = vst.msk [vmem:[%s227 + $0x40] sm:$0xff] %vm470, %v462
      %480 = vst.msk [vmem:[%s227 + $0x48] sm:$0xff] %vm470, %v463
      %481 = vst.msk [vmem:[%s227 + $0x50] sm:$0xff] %vm470, %v464
      %482 = vst.msk [vmem:[%s227 + $0x58] sm:$0xff] %vm470, %v465
      %483 = vst.msk [vmem:[%s227 + $0x60] sm:$0xff] %vm470, %v466
      %484 = vst.msk [vmem:[%s227 + $0x68] sm:$0xff] %vm470, %v467
      %485 = vst.msk [vmem:[%s227 + $0x70] sm:$0xff] %vm470, %v468
      %486 = vst.msk [vmem:[%s227 + $0x78] sm:$0xff] %vm470, %v469
      %s487 = smul.u32 16, %s17
      %p488 = scmp.lt.s32.totalorder %s487, 63
      %s489 = scalar_select %p488, %s487, 63
      %s490 = smul.addr %s489, 8
      %s491 = scalar_lea.vmem %s5, %s490
      // Predicated region
      $region41: #{tpu_custom_call.1} parent=39 // pred_check
        %p492 = pneg %p145
      $region42: #{tpu_custom_call.1} parent=39 // pred_check_branch
        %494 = sbr.rel (%p492) target = $region44
      $region43: #{tpu_custom_call.1} parent=39 // pred_region
        %s495 = smul.u32 16, %s17
      $region44: #{tpu_custom_call.1} parent=39 // pred_fallthru
        _
    $region40: #{tpu_custom_call.1} parent=5 // pred_fallthru
      _
    %p496 = scmp.le.s32.totalorder 2, %s12
    // Predicated region
    $region45: #{tpu_custom_call.1} parent=5 // pred_check
      %p497 = pneg %p496
    $region46: #{tpu_custom_call.1} parent=5 // pred_check_branch
      %499 = sbr.rel (%p497) target = $region48
    $region47: #{tpu_custom_call.1} parent=5 // pred_region
      %s500 = ssub.s32 %s12, 2
      // Predicated region
      $region49: #{tpu_custom_call.1} parent=47 // pred_check
        %p501 = pneg %p151
      $region50: #{tpu_custom_call.1} parent=47 // pred_check_branch
        %503 = sbr.rel (%p501) target = $region52
      $region51: #{tpu_custom_call.1} parent=47 // pred_region
        %s504 = smul.u32 16, %s18
        %p505 = scmp.lt.s32.totalorder %s504, 63
        %s506 = scalar_select %p505, %s504, 63
        %s507 = smul.addr %s506, 8
        %s508 = scalar_lea.vmem %s5, %s507
      $region52: #{tpu_custom_call.1} parent=47 // pred_fallthru
        _
    $region48: #{tpu_custom_call.1} parent=5 // pred_fallthru
      _
  $region6: #{tpu_custom_call.1} parent=0 // loop_footer
    %s16 = sadd.s32 1, %s12
  $region7: #{tpu_custom_call.1} parent=0 // loop_footer_branch
    %11 = sbr.rel target = $region3
  $region8: #{tpu_custom_call.1} parent=0 // loop_exit
    _

</llo_original>
